<compile_context>
chip_gen: v6e
topology: v6e:2x2x1
jax: 0.10.0
libtpu: 0.0.40
codegen_flags: <defaults>
</compile_context>

<pallas_src>
import functools

import jax
import jax.numpy as jnp
from jax.experimental import pallas as pl
from jax.experimental.pallas import tpu as pltpu


def _round_up(n, m):
    return ((n + m - 1) // m) * m


def _cdiv(a, b):
    return -(-a // b)


def _choose_batch_tile(B, b_tile):
    """Sublane-aligned batch tile <= b_tile with an even block count (>=2)
    whenever possible, so v7x's two TensorCores split the batch evenly."""
    B8 = _round_up(B, 8)
    if B8 <= 16:  # too small to split usefully across cores
        return B8
    n = max(2, 2 * _cdiv(B8, 2 * b_tile))  # even target block count
    return min(b_tile, _round_up(_cdiv(B8, n), 8))


def _mlp_kernel(x_ref, w1_ref, b1_ref, w2_ref, b2_ref, o_ref, *, compute_bf16):
    # One (Bt, F) row-tile of x per grid step; weights/biases are VMEM-resident
    # (constant index_map) and arrive already in their compute dtype.
    x = x_ref[...]
    if compute_bf16:
        x = x.astype(jnp.bfloat16)  # tiny (Bt, F) cast; weights pre-cast in HBM

    # MXU matmul, f32 accumulation; bias add + ReLU in f32 on the VPU.
    h = jnp.dot(x, w1_ref[...], preferred_element_type=jnp.float32)
    h = jnp.maximum(h + b1_ref[...], 0.0)

    if compute_bf16:
        h = h.astype(jnp.bfloat16)
    y = jnp.dot(h, w2_ref[...], preferred_element_type=jnp.float32)
    o_ref[...] = (y + b2_ref[...]).astype(o_ref.dtype)


def wrapped_model_forward(x, w1, b1, w2, b2, *, b_tile=1024, use_bf16=True):
    """Pallas equivalent of WrappedModel(base_mlp)(x).

    use_bf16=True  : bf16 MXU matmuls, f32 accumulation (fast default).
    use_bf16=False : full f32 path for accuracy-critical SHAP attribution work.
    """
    B, F = x.shape
    H = w1.shape[1]
    C = w2.shape[1]
    Hp = _round_up(H, 128)  # lane-dense hidden dim; weights are tiny so this is free

    w_dtype = jnp.bfloat16 if use_bf16 else jnp.float32
    f32 = jnp.float32
    # Only the small, grid-invariant operands get padded / pre-cast.  x and the
    # output stay unpadded so there is no wrapper-side HBM round trip on them.
    w1_p = jnp.zeros((F, Hp), w_dtype).at[:, :H].set(w1.astype(w_dtype))
    b1_p = jnp.zeros((1, Hp), f32).at[:, :H].set(b1.reshape(1, H).astype(f32))
    w2_p = jnp.zeros((Hp, C), w_dtype).at[:H, :].set(w2.astype(w_dtype))
    b2_p = b2.reshape(1, C).astype(f32)

    Bt = _choose_batch_tile(B, b_tile)
    n_tiles = _cdiv(B, Bt)  # partial last block: OOB reads are row-independent,
    #                         OOB output writes are dropped by Pallas.

    w_itemsize = 2 if use_bf16 else 4
    flops = 2 * B * (F * Hp + Hp * C)
    bytes_accessed = (
        B * F * x.dtype.itemsize          # x read
        + (F * Hp + Hp * C) * w_itemsize  # weights
        + (Hp + C) * 4                    # biases
        + B * C * 4                       # output write
    )

    out = pl.pallas_call(
        functools.partial(_mlp_kernel, compute_bf16=use_bf16),
        out_shape=jax.ShapeDtypeStruct((B, C), jnp.float32),
        grid=(n_tiles,),
        in_specs=[
            pl.BlockSpec((Bt, F), lambda i: (i, 0)),   # x: tiled over batch, unpadded
            pl.BlockSpec((F, Hp), lambda i: (0, 0)),   # W1: resident
            pl.BlockSpec((1, Hp), lambda i: (0, 0)),   # b1: resident
            pl.BlockSpec((Hp, C), lambda i: (0, 0)),   # W2: resident
            pl.BlockSpec((1, C), lambda i: (0, 0)),    # b2: resident
        ],
        out_specs=pl.BlockSpec((Bt, C), lambda i: (i, 0)),  # unpadded (B, C) output
        compiler_params=pltpu.CompilerParams(
            dimension_semantics=("parallel",),
        ),
        cost_estimate=pl.CostEstimate(
            flops=flops, transcendentals=0, bytes_accessed=bytes_accessed
        ),
    )(x, w1_p, b1_p, w2_p, b2_p)

    return out


def reference_forward(x, w1, b1, w2, b2):
    h = jnp.maximum(x @ w1 + b1, 0.0)
    return h @ w2 + b2


if __name__ == "__main__":
    # Small shapes consistent with a tabular SHAP setup.
    B, F, H, C = 8, 16, 32, 4

    key = jax.random.PRNGKey(0)
    kx, kw1, kb1, kw2, kb2 = jax.random.split(key, 5)

    x = jax.random.normal(kx, (B, F), dtype=jnp.float32)
    # Deterministic "torch-like" init (uniform in +/- 1/sqrt(fan_in)).
    w1 = jax.random.uniform(kw1, (F, H), jnp.float32, -1.0 / F ** 0.5, 1.0 / F ** 0.5)
    b1 = jax.random.uniform(kb1, (1, H), jnp.float32, -1.0 / F ** 0.5, 1.0 / F ** 0.5)
    w2 = jax.random.uniform(kw2, (H, C), jnp.float32, -1.0 / H ** 0.5, 1.0 / H ** 0.5)
    b2 = jax.random.uniform(kb2, (1, C), jnp.float32, -1.0 / H ** 0.5, 1.0 / H ** 0.5)

    ref = reference_forward(x, w1, b1, w2, b2)

    # Default bf16-MXU path.
    out = jax.block_until_ready(wrapped_model_forward(x, w1, b1, w2, b2))
    assert out.shape == (B, C)
    assert jnp.allclose(out, ref, atol=5e-2, rtol=5e-2), "bf16 small-batch mismatch"

    # f32 path (accuracy-critical SHAP attribution use).
    out_f32 = jax.block_until_ready(
        wrapped_model_forward(x, w1, b1, w2, b2, use_bf16=False)
    )
    assert jnp.allclose(out_f32, ref, atol=2e-2, rtol=2e-2), "f32 small-batch mismatch"

    # Large SHAP-style batch of perturbed rows: non-multiple of the tile,
    # exercises partial blocks and the 2-block / 2-TensorCore split.
    B_big = 600
    x_big = jax.random.normal(jax.random.PRNGKey(1), (B_big, F), dtype=jnp.float32)
    out_big = jax.block_until_ready(wrapped_model_forward(x_big, w1, b1, w2, b2))
    ref_big = reference_forward(x_big, w1, b1, w2, b2)
    assert out_big.shape == (B_big, C)
    assert jnp.allclose(out_big, ref_big, atol=5e-2, rtol=5e-2), "big-batch mismatch"

    print("KERNEL_OK")
</pallas_src>

<mosaic_0001>
module attributes {stable_mosaic.version = 11 : i64} {
  func.func @_mlp_kernel(%arg0: i32, %arg1: memref<8x16xf32, #tpu.memory_space<vmem>>, %arg2: memref<16x128xbf16, #tpu.memory_space<vmem>>, %arg3: memref<1x128xf32, #tpu.memory_space<vmem>>, %arg4: memref<128x4xbf16, #tpu.memory_space<vmem>>, %arg5: memref<1x4xf32, #tpu.memory_space<vmem>>, %arg6: memref<8x4xf32, #tpu.memory_space<vmem>>) attributes {dimension_semantics = [#tpu.dimension_semantics<parallel>], iteration_bounds = array<i64: 1>, scalar_prefetch = 0 : i64, scratch_operands = 0 : i64, tpu.core_type = #tpu.core_type<tc>, window_params = [{transform_indices = @transform_0, window_bounds = array<i64: 8, 16>}, {pipeline_mode = #tpu.pipeline_mode<synchronous>, transform_indices = @transform_1, window_bounds = array<i64: 16, 128>}, {pipeline_mode = #tpu.pipeline_mode<synchronous>, transform_indices = @transform_2, window_bounds = array<i64: 1, 128>}, {pipeline_mode = #tpu.pipeline_mode<synchronous>, transform_indices = @transform_3, window_bounds = array<i64: 128, 4>}, {pipeline_mode = #tpu.pipeline_mode<synchronous>, transform_indices = @transform_4, window_bounds = array<i64: 1, 4>}, {transform_indices = @transform_5, window_bounds = array<i64: 8, 4>}]} {
    %c0 = arith.constant 0 : index
    %c0_0 = arith.constant 0 : index
    %0 = vector.load %arg1[%c0, %c0_0] : memref<8x16xf32, #tpu.memory_space<vmem>>, vector<8x16xf32>
    %1 = arith.truncf %0 : vector<8x16xf32> to vector<8x16xbf16>
    %c0_1 = arith.constant 0 : index
    %c0_2 = arith.constant 0 : index
    %2 = vector.load %arg2[%c0_1, %c0_2] : memref<16x128xbf16, #tpu.memory_space<vmem>>, vector<16x128xbf16>
    %cst = arith.constant dense<0.000000e+00> : vector<8x128xf32>
    %3 = tpu.matmul %1, %2, %cst {dimension_numbers = #tpu.dot_dimension_numbers<[1], [0], [0], [1], [0, 0, 1, 1], [], []>} : vector<8x16xbf16>, vector<16x128xbf16>, vector<8x128xf32> -> vector<8x128xf32>
    %c0_3 = arith.constant 0 : index
    %c0_4 = arith.constant 0 : index
    %4 = vector.load %arg3[%c0_3, %c0_4] : memref<1x128xf32, #tpu.memory_space<vmem>>, vector<1x128xf32>
    %5 = vector.broadcast %4 : vector<1x128xf32> to vector<8x128xf32>
    %6 = arith.addf %3, %5 : vector<8x128xf32>
    %cst_5 = arith.constant 0.000000e+00 : f32
    %7 = vector.broadcast %cst_5 : f32 to vector<8x128xf32>
    %8 = arith.maximumf %6, %7 : vector<8x128xf32>
    %9 = arith.truncf %8 : vector<8x128xf32> to vector<8x128xbf16>
    %c0_6 = arith.constant 0 : index
    %c0_7 = arith.constant 0 : index
    %10 = vector.load %arg4[%c0_6, %c0_7] : memref<128x4xbf16, #tpu.memory_space<vmem>>, vector<128x4xbf16>
    %cst_8 = arith.constant dense<0.000000e+00> : vector<8x4xf32>
    %11 = tpu.matmul %9, %10, %cst_8 {dimension_numbers = #tpu.dot_dimension_numbers<[1], [0], [0], [1], [0, 0, 1, 1], [], []>} : vector<8x128xbf16>, vector<128x4xbf16>, vector<8x4xf32> -> vector<8x4xf32>
    %c0_9 = arith.constant 0 : index
    %c0_10 = arith.constant 0 : index
    %12 = vector.load %arg5[%c0_9, %c0_10] : memref<1x4xf32, #tpu.memory_space<vmem>>, vector<1x4xf32>
    %13 = vector.broadcast %12 : vector<1x4xf32> to vector<8x4xf32>
    %14 = arith.addf %11, %13 : vector<8x4xf32>
    %c0_11 = arith.constant 0 : index
    %c0_12 = arith.constant 0 : index
    %15 = vector.load %arg6[%c0_11, %c0_12] : memref<8x4xf32, #tpu.memory_space<vmem>>, vector<8x4xf32>
    tpu.vector_store %arg6[%c0_11, %c0_12], %14 {strides = array<i32>} : memref<8x4xf32, #tpu.memory_space<vmem>>, vector<8x4xf32>,
    return
  }
  func.func @transform_0(%arg0: i32) -> (i32, i32) {
    %c0_i32 = arith.constant 0 : i32
    %c0_i32_0 = arith.constant 0 : i32
    return %arg0, %c0_i32 : i32, i32
  }
  func.func @transform_1(%arg0: i32) -> (i32, i32) {
    %c0_i32 = arith.constant 0 : i32
    %c0_i32_0 = arith.constant 0 : i32
    %c0_i32_1 = arith.constant 0 : i32
    return %c0_i32, %c0_i32_0 : i32, i32
  }
  func.func @transform_2(%arg0: i32) -> (i32, i32) {
    %c0_i32 = arith.constant 0 : i32
    %c0_i32_0 = arith.constant 0 : i32
    %c0_i32_1 = arith.constant 0 : i32
    return %c0_i32, %c0_i32_0 : i32, i32
  }
  func.func @transform_3(%arg0: i32) -> (i32, i32) {
    %c0_i32 = arith.constant 0 : i32
    %c0_i32_0 = arith.constant 0 : i32
    %c0_i32_1 = arith.constant 0 : i32
    return %c0_i32, %c0_i32_0 : i32, i32
  }
  func.func @transform_4(%arg0: i32) -> (i32, i32) {
    %c0_i32 = arith.constant 0 : i32
    %c0_i32_0 = arith.constant 0 : i32
    %c0_i32_1 = arith.constant 0 : i32
    return %c0_i32, %c0_i32_0 : i32, i32
  }
  func.func @transform_5(%arg0: i32) -> (i32, i32) {
    %c0_i32 = arith.constant 0 : i32
    %c0_i32_0 = arith.constant 0 : i32
    return %arg0, %c0_i32 : i32, i32
  }
}

</mosaic_0001>

<llo_original>
// kernel: tpu_custom_call.1
$region0: #{tpu_custom_call.1}
  #allocation0 [shape = 'u32[]', space=smem, size = 0x4, offset = 0x4, fixed_abs, tag = 'smem constant byte address 0x4 - core index']
  #allocation1 [shape = 'u32[144,128]{1,0:T(1,128)}', space=vmem, size = 0x12000, scoped, tag = 'internal scratch']
  %s0 = inlined_call_operand.vmem [shape: f32[8,16], index: 0, kind: input, shape index: {}]
  %s1 = inlined_call_operand.vmem [shape: bf16[16,128], index: 1, kind: input, shape index: {}]
  %s2 = inlined_call_operand.vmem [shape: f32[1,128], index: 2, kind: input, shape index: {}]
  %s3 = inlined_call_operand.vmem [shape: bf16[128,4], index: 3, kind: input, shape index: {}]
  %s4 = inlined_call_operand.vmem [shape: f32[1,4], index: 4, kind: input, shape index: {}]
  %s5 = inlined_call_operand.vmem [shape: f32[8,4], index: 5, kind: output, shape index: {}]
  %s6 = sld [smem:[#allocation0]]
  $region30: #{tpu_custom_call.1} parent=0
    _
  %s8 = ssub.s32 1, %s6
  %s9 = scalar_select 0, %s8, %s6
  // Predicated region
  $region2: #{tpu_custom_call.1} parent=0 // pred_check
    _
  $region3: #{tpu_custom_call.1} parent=0 // pred_check_branch
    %11 = sbr.rel (0) target = $region5
  $region4: #{tpu_custom_call.1} parent=0 // pred_region
    _
  $region5: #{tpu_custom_call.1} parent=0 // pred_fallthru
    _
  // Predicated region
  $region6: #{tpu_custom_call.1} parent=0 // pred_check
    _
  $region7: #{tpu_custom_call.1} parent=0 // pred_check_branch
    %13 = sbr.rel (0) target = $region9
  $region8: #{tpu_custom_call.1} parent=0 // pred_region
    _
  $region9: #{tpu_custom_call.1} parent=0 // pred_fallthru
    _
  // Predicated region
  $region10: #{tpu_custom_call.1} parent=0 // pred_check
    _
  $region11: #{tpu_custom_call.1} parent=0 // pred_check_branch
    %15 = sbr.rel (0) target = $region13
  $region12: #{tpu_custom_call.1} parent=0 // pred_region
    _
  $region13: #{tpu_custom_call.1} parent=0 // pred_fallthru
    _
  // Predicated region
  $region14: #{tpu_custom_call.1} parent=0 // pred_check
    _
  $region15: #{tpu_custom_call.1} parent=0 // pred_check_branch
    %17 = sbr.rel (0) target = $region17
  $region16: #{tpu_custom_call.1} parent=0 // pred_region
    _
  $region17: #{tpu_custom_call.1} parent=0 // pred_fallthru
    _
  // Predicated region
  $region18: #{tpu_custom_call.1} parent=0 // pred_check
    _
  $region19: #{tpu_custom_call.1} parent=0 // pred_check_branch
    %19 = sbr.rel (0) target = $region21
  $region20: #{tpu_custom_call.1} parent=0 // pred_region
    _
  $region21: #{tpu_custom_call.1} parent=0 // pred_fallthru
    _
  %v21 = vld [vmem:[%s0] sm:$0xff]
  %v22 = vpack.c.bf16 %v21, %v21
  %v23 = vld [vmem:[%s1] sm:$0xf]
  %v24 = vld [vmem:[%s1 + $0x4] sm:$0xf]
  %v25 = vld [vmem:[%s2] sm:$0x1]
  %v27 = vlaneseq
  %v28 = vshrl.u32 %v27, 7
  %v29 = vsub.s32 0, %v28
  %v30 = vrot.slane %v25, %v29
  %v34 = vunpack.c.l.b16 %v23
  %v35 = vunpack.c.l.b16 %v24
  %v36 = vpack.c.b16 %v35, %v34
  %vm38 = vcmask 130048
  %v40 = vsel %vm38, %v22, 0
  %42 = vmatprep.subr.bf16.mxu0 0
  %43 = vmatpush1.bf16.msra.mxu0 0
  %44 = vmatprep.subr.bf16.mxu0 0
  %45 = vmatpush1.bf16.msra.mxu0 0
  %46 = vmatprep.subr.bf16.mxu0 0
  %47 = vmatpush1.bf16.msra.mxu0 0
  %48 = vmatprep.subr.bf16.mxu0 0
  %49 = vmatpush1.bf16.msra.mxu0 0
  %50 = vmatprep.subr.bf16.mxu0 0
  %51 = vmatpush1.bf16.msra.mxu0 0
  %52 = vmatprep.subr.bf16.mxu0 0
  %53 = vmatpush1.bf16.msra.mxu0 0
  %54 = vmatprep.subr.bf16.mxu0 0
  %55 = vmatpush1.bf16.msra.mxu0 0
  %56 = vmatprep.subr.bf16.mxu0 0
  %57 = vmatpush1.bf16.msra.mxu0 %v36
  %58 = vmatprep.subr.bf16.mxu0 0
  %59 = vmatpush2.bf16.msra.mxu0 0
  %60 = vmatprep.subr.bf16.mxu0 0
  %61 = vmatpush2.bf16.msra.mxu0 0
  %62 = vmatprep.subr.bf16.mxu0 0
  %63 = vmatpush2.bf16.msra.mxu0 0
  %64 = vmatprep.subr.bf16.mxu0 0
  %65 = vmatpush2.bf16.msra.mxu0 0
  %66 = vmatprep.subr.bf16.mxu0 0
  %67 = vmatpush2.bf16.msra.mxu0 0
  %68 = vmatprep.subr.bf16.mxu0 0
  %69 = vmatpush2.bf16.msra.mxu0 0
  %70 = vmatprep.subr.bf16.mxu0 0
  %71 = vmatpush2.bf16.msra.mxu0 0
  %72 = vmatprep.subr.bf16.mxu0 0
  %73 = vmatpush2.bf16.msra.mxu0 0
  %74 = vmatprep.mubr.bf16.mxu0 0
  %75 = vmatmul.mubr.bf16.gmra.mxu0 %v40
  %v76 = vpop.f32.mrf.mxu0
  %v77 = vadd.f32 %v30, %v76
  %v78 = vpop.f32.mrf.mxu0
  %v79 = vpop.f32.mrf.mxu0
  %v80 = vpop.f32.mrf.mxu0
  %81 = vdwg.mxu0
  %v82 = vmax.f32 %v77, 0.0
  %v83 = vpack.c.bf16 %v82, %v82
  %v84 = vld [vmem:[%s3] sm:$0xf]
  %v85 = vld [vmem:[%s3 + $0x4] sm:$0xf]
  %v86 = vld [vmem:[%s3 + $0x8] sm:$0xf]
  %v87 = vld [vmem:[%s3 + $0xc] sm:$0xf]
  %v88 = vld [vmem:[%s3 + $0x10] sm:$0xf]
  %v89 = vld [vmem:[%s3 + $0x14] sm:$0xf]
  %v90 = vld [vmem:[%s3 + $0x18] sm:$0xf]
  %v91 = vld [vmem:[%s3 + $0x1c] sm:$0xf]
  %v92 = vld [vmem:[%s3 + $0x20] sm:$0xf]
  %v93 = vld [vmem:[%s3 + $0x24] sm:$0xf]
  %v94 = vld [vmem:[%s3 + $0x28] sm:$0xf]
  %v95 = vld [vmem:[%s3 + $0x2c] sm:$0xf]
  %v96 = vld [vmem:[%s3 + $0x30] sm:$0xf]
  %v97 = vld [vmem:[%s3 + $0x34] sm:$0xf]
  %v98 = vld [vmem:[%s3 + $0x38] sm:$0xf]
  %v99 = vld [vmem:[%s3 + $0x3c] sm:$0xf]
  %v100 = vld [vmem:[%s4] sm:$0x1]
  %v102 = vlaneseq
  %v103 = vshrl.u32 %v102, 7
  %v104 = vsub.s32 0, %v103
  %v105 = vrot.slane %v100, %v104
  %v123 = vunpack.c.l.b16 %v84
  %v124 = vunpack.c.l.b16 %v85
  %v125 = vunpack.c.l.b16 %v86
  %v126 = vunpack.c.l.b16 %v87
  %v127 = vunpack.c.l.b16 %v88
  %v128 = vunpack.c.l.b16 %v89
  %v129 = vunpack.c.l.b16 %v90
  %v130 = vunpack.c.l.b16 %v91
  %v131 = vunpack.c.l.b16 %v92
  %v132 = vunpack.c.l.b16 %v93
  %v133 = vunpack.c.l.b16 %v94
  %v134 = vunpack.c.l.b16 %v95
  %v135 = vunpack.c.l.b16 %v96
  %v136 = vunpack.c.l.b16 %v97
  %v137 = vunpack.c.l.b16 %v98
  %v138 = vunpack.c.l.b16 %v99
  %v139 = vpack.c.b16 %v124, %v123
  %v140 = vpack.c.b16 %v126, %v125
  %v141 = vpack.c.b16 %v128, %v127
  %v142 = vpack.c.b16 %v130, %v129
  %v143 = vpack.c.b16 %v132, %v131
  %v144 = vpack.c.b16 %v134, %v133
  %v145 = vpack.c.b16 %v136, %v135
  %v146 = vpack.c.b16 %v138, %v137
  %155 = vmatprep.subr.bf16.mxu0 0
  %156 = vmatpush1.bf16.msra.mxu0 %v146
  %157 = vmatprep.subr.bf16.mxu0 0
  %158 = vmatpush1.bf16.msra.mxu0 %v145
  %159 = vmatprep.subr.bf16.mxu0 0
  %160 = vmatpush1.bf16.msra.mxu0 %v144
  %161 = vmatprep.subr.bf16.mxu0 0
  %162 = vmatpush1.bf16.msra.mxu0 %v143
  %163 = vmatprep.subr.bf16.mxu0 0
  %164 = vmatpush1.bf16.msra.mxu0 %v142
  %165 = vmatprep.subr.bf16.mxu0 0
  %166 = vmatpush1.bf16.msra.mxu0 %v141
  %167 = vmatprep.subr.bf16.mxu0 0
  %168 = vmatpush1.bf16.msra.mxu0 %v140
  %169 = vmatprep.subr.bf16.mxu0 0
  %170 = vmatpush1.bf16.msra.mxu0 %v139
  %171 = vmatprep.subr.bf16.mxu0 0
  %172 = vmatpush2.bf16.msra.mxu0 0
  %173 = vmatprep.subr.bf16.mxu0 0
  %174 = vmatpush2.bf16.msra.mxu0 0
  %175 = vmatprep.subr.bf16.mxu0 0
  %176 = vmatpush2.bf16.msra.mxu0 0
  %177 = vmatprep.subr.bf16.mxu0 0
  %178 = vmatpush2.bf16.msra.mxu0 0
  %179 = vmatprep.subr.bf16.mxu0 0
  %180 = vmatpush2.bf16.msra.mxu0 0
  %181 = vmatprep.subr.bf16.mxu0 0
  %182 = vmatpush2.bf16.msra.mxu0 0
  %183 = vmatprep.subr.bf16.mxu0 0
  %184 = vmatpush2.bf16.msra.mxu0 0
  %185 = vmatprep.subr.bf16.mxu0 0
  %186 = vmatpush2.bf16.msra.mxu0 0
  %187 = vmatprep.mubr.bf16.mxu0 0
  %188 = vmatmul.mubr.bf16.gmra.mxu0 %v83
  %v189 = vpop.f32.mrf.mxu0
  %v190 = vadd.f32 %v105, %v189
  %v191 = vpop.f32.mrf.mxu0
  %v192 = vpop.f32.mrf.mxu0
  %v193 = vpop.f32.mrf.mxu0
  %194 = vdwg.mxu0
  %vm195 = vcmask 31744
  %196 = vst.msk [vmem:[%s5] sm:$0xff] %vm195, %v190
  // Predicated region
  $region22: #{tpu_custom_call.1} parent=0 // pred_check
    _
  $region23: #{tpu_custom_call.1} parent=0 // pred_check_branch
    %198 = sbr.rel (0) target = $region25
  $region24: #{tpu_custom_call.1} parent=0 // pred_region
    _
  $region25: #{tpu_custom_call.1} parent=0 // pred_fallthru
    _
  // Predicated region
  $region26: #{tpu_custom_call.1} parent=0 // pred_check
    _
  $region27: #{tpu_custom_call.1} parent=0 // pred_check_branch
    %200 = sbr.rel (0) target = $region29
  $region28: #{tpu_custom_call.1} parent=0 // pred_region
    _
  $region29: #{tpu_custom_call.1} parent=0 // pred_fallthru
    _

</llo_original>
